<compile_context>
chip_gen: v6e
topology: v6e:2x2x1
jax: 0.10.0
libtpu: 0.0.40
codegen_flags: <defaults>
</compile_context>

<pallas_src>
import math

import jax
import jax.numpy as jnp
from jax import lax
from jax.experimental import pallas as pl
from jax.experimental.pallas import tpu as pltpu


def _gelu_exact(x):
    # exact GELU: 0.5 * x * (1 + erf(x / sqrt(2)))  (matches torch.nn.GELU default)
    return 0.5 * x * (1.0 + lax.erf(x * (1.0 / math.sqrt(2.0))))


def mlp_kernel(x_ref, w1_ref, b1_ref, w2_ref, b2_ref, o_ref, acc_ref):
    """Grid = (M_tiles, hidden_tiles).  Axis 1 is the streamed hidden reduction.

    x_ref  : (tm, in_dim)      compute dtype
    w1_ref : (in_dim, th)      compute dtype   (hidden slice k)
    b1_ref : (1, th)           f32             (hidden slice k)
    w2_ref : (th, out_dim)     compute dtype   (hidden slice k)
    b2_ref : (1, out_dim)      f32
    o_ref  : (tm, out_dim)     output dtype
    acc_ref: (tm, out_dim)     f32 VMEM accumulator (resident across axis 1)
    """
    k = pl.program_id(1)

    @pl.when(k == 0)
    def _():
        acc_ref[...] = jnp.zeros_like(acc_ref)

    # fc1 slice: (tm, in_dim) @ (in_dim, th) -> f32
    h = jnp.dot(x_ref[...], w1_ref[...], preferred_element_type=jnp.float32)
    h = h + b1_ref[...]
    h = _gelu_exact(h)

    # fc2 partial: (tm, th) @ (th, out_dim), accumulate in f32
    acc_ref[...] += jnp.dot(h.astype(w2_ref.dtype), w2_ref[...],
                            preferred_element_type=jnp.float32)

    @pl.when(k == pl.num_programs(1) - 1)
    def _():
        o_ref[...] = (acc_ref[...] + b2_ref[...]).astype(o_ref.dtype)


def _round_up(x, m):
    return (x + m - 1) // m * m


def _pad2d(a, rows, cols):
    return jnp.pad(a, ((0, rows - a.shape[0]), (0, cols - a.shape[1])))


def mlp_pallas(x, w1, b1, w2, b2, *, tm=256, th=512, compute_dtype=None):
    """x: (batch, seq, in_dim).  w1: (in_dim, hidden), w2: (hidden, out_dim).

    compute_dtype: dtype for the MXU operands (e.g. jnp.bfloat16); accumulation
    is always f32. Defaults to x.dtype.
    """
    batch, seq, in_dim = x.shape
    hidden = w1.shape[1]
    out_dim = w2.shape[1]
    M = batch * seq
    out_dtype = x.dtype
    if compute_dtype is None:
        compute_dtype = x.dtype

    # Lane-dense (multiple-of-128) feature dims; padded regions are zeros and
    # contribute exactly zero to every dot product.
    in_p = _round_up(in_dim, 128)
    hid_p = _round_up(hidden, 128)
    out_p = _round_up(out_dim, 128)

    # Row tile: large, but clamped / padded so the grid divides evenly.
    tm = min(tm, _round_up(M, 128))
    M_p = _round_up(M, tm)

    # Hidden tile: a multiple of 128 that divides the padded hidden dim.
    th = min(_round_up(th, 128), hid_p)
    while hid_p % th:
        th -= 128

    x2d = _pad2d(x.reshape(M, in_dim).astype(compute_dtype), M_p, in_p)
    w1p = _pad2d(w1.astype(compute_dtype), in_p, hid_p)
    w2p = _pad2d(w2.astype(compute_dtype), hid_p, out_p)
    b1p = jnp.pad(b1.astype(jnp.float32), (0, hid_p - hidden)).reshape(1, hid_p)
    b2p = jnp.pad(b2.astype(jnp.float32), (0, out_p - out_dim)).reshape(1, out_p)

    grid = (M_p // tm, hid_p // th)

    out2d = pl.pallas_call(
        mlp_kernel,
        out_shape=jax.ShapeDtypeStruct((M_p, out_p), out_dtype),
        grid_spec=pltpu.PrefetchScalarGridSpec(
            num_scalar_prefetch=0,
            grid=grid,
            in_specs=[
                pl.BlockSpec((tm, in_p), lambda i, k: (i, 0)),    # x tile (reused over k)
                pl.BlockSpec((in_p, th), lambda i, k: (0, k)),    # W1 hidden slice
                pl.BlockSpec((1, th), lambda i, k: (0, k)),       # b1 hidden slice
                pl.BlockSpec((th, out_p), lambda i, k: (k, 0)),   # W2 hidden slice
                pl.BlockSpec((1, out_p), lambda i, k: (0, 0)),    # b2
            ],
            out_specs=pl.BlockSpec((tm, out_p), lambda i, k: (i, 0)),
            scratch_shapes=[pltpu.VMEM((tm, out_p), jnp.float32)],
        ),
        compiler_params=pltpu.CompilerParams(
            dimension_semantics=("parallel", "arbitrary")),
    )(x2d, w1p, b1p, w2p, b2p)

    return out2d[:M, :out_dim].reshape(batch, seq, out_dim)


def mlp_reference(x, w1, b1, w2, b2):
    h = jnp.einsum("bsi,ih->bsh", x, w1) + b1
    h = 0.5 * h * (1.0 + lax.erf(h / math.sqrt(2.0)))
    return jnp.einsum("bsh,ho->bso", h, w2) + b2


if __name__ == "__main__":
    # Small shapes consistent with the module's forward: (batch, seq, in_dim)
    batch, seq = 2, 8
    in_dim, hidden_dim, out_dim = 32, 64, 32

    key = jax.random.PRNGKey(0)
    kx, k1, kb1, k2, kb2 = jax.random.split(key, 5)

    x = jax.random.normal(kx, (batch, seq, in_dim), dtype=jnp.float32)

    # PyTorch nn.Linear-shaped weights, pre-transposed so the kernel does x @ W.
    w1_pt = jax.random.normal(k1, (hidden_dim, in_dim), dtype=jnp.float32) * 0.1
    b1 = jax.random.normal(kb1, (hidden_dim,), dtype=jnp.float32) * 0.1
    w2_pt = jax.random.normal(k2, (out_dim, hidden_dim), dtype=jnp.float32) * 0.1
    b2 = jax.random.normal(kb2, (out_dim,), dtype=jnp.float32) * 0.1

    w1 = w1_pt.T  # (in_dim, hidden)
    w2 = w2_pt.T  # (hidden, out_dim)

    ref = mlp_reference(x, w1, b1, w2, b2)

    # f32 path (exact parity check with the reference)
    out_f32 = jax.block_until_ready(mlp_pallas(x, w1, b1, w2, b2))
    assert out_f32.shape == (batch, seq, out_dim)
    assert jnp.allclose(out_f32, ref, atol=1e-4, rtol=1e-4), "f32 mismatch vs reference"

    # bf16 MXU-operand path (f32 accumulation) — expected small quantization error.
    out_bf16 = jax.block_until_ready(
        mlp_pallas(x, w1, b1, w2, b2, compute_dtype=jnp.bfloat16))
    assert out_bf16.shape == (batch, seq, out_dim)
    assert jnp.max(jnp.abs(out_bf16 - ref)) < 5e-2, "bf16 mismatch vs reference"

    print("KERNEL_OK")
</pallas_src>

<mosaic_0001>
module attributes {stable_mosaic.version = 11 : i64} {
  func.func @mlp_kernel(%arg0: i32, %arg1: i32, %arg2: memref<128x128xf32, #tpu.memory_space<vmem>>, %arg3: memref<128x128xf32, #tpu.memory_space<vmem>>, %arg4: memref<1x128xf32, #tpu.memory_space<vmem>>, %arg5: memref<128x128xf32, #tpu.memory_space<vmem>>, %arg6: memref<1x128xf32, #tpu.memory_space<vmem>>, %arg7: memref<128x128xf32, #tpu.memory_space<vmem>>, %arg8: memref<128x128xf32, #tpu.memory_space<vmem>>) attributes {dimension_semantics = [#tpu.dimension_semantics<parallel>, #tpu.dimension_semantics<arbitrary>], iteration_bounds = array<i64: 1, 1>, scalar_prefetch = 0 : i64, scratch_operands = 1 : i64, tpu.core_type = #tpu.core_type<tc>, window_params = [{transform_indices = @transform_0, window_bounds = array<i64: 128, 128>}, {transform_indices = @transform_1, window_bounds = array<i64: 128, 128>}, {transform_indices = @transform_2, window_bounds = array<i64: 1, 128>}, {transform_indices = @transform_3, window_bounds = array<i64: 128, 128>}, {pipeline_mode = #tpu.pipeline_mode<synchronous>, transform_indices = @transform_4, window_bounds = array<i64: 1, 128>}, {transform_indices = @transform_5, window_bounds = array<i64: 128, 128>}]} {
    %c0_i32 = arith.constant 0 : i32
    %0 = arith.cmpi eq, %arg1, %c0_i32 : i32
    %1 = arith.extui %0 : i1 to i32
    %c0_i32_0 = arith.constant 0 : i32
    %2 = arith.cmpi ne, %1, %c0_i32_0 : i32
    scf.if %2 {
      %cst_18 = arith.constant 0.000000e+00 : f32
      %25 = vector.broadcast %cst_18 : f32 to vector<128x128xf32>
      %c0_19 = arith.constant 0 : index
      %c0_20 = arith.constant 0 : index
      %26 = vector.load %arg8[%c0_19, %c0_20] : memref<128x128xf32, #tpu.memory_space<vmem>>, vector<128x128xf32>
      tpu.vector_store %arg8[%c0_19, %c0_20], %25 {strides = array<i32>} : memref<128x128xf32, #tpu.memory_space<vmem>>, vector<128x128xf32>,
    } else {
    }
    %c0 = arith.constant 0 : index
    %c0_1 = arith.constant 0 : index
    %3 = vector.load %arg2[%c0, %c0_1] : memref<128x128xf32, #tpu.memory_space<vmem>>, vector<128x128xf32>
    %c0_2 = arith.constant 0 : index
    %c0_3 = arith.constant 0 : index
    %4 = vector.load %arg3[%c0_2, %c0_3] : memref<128x128xf32, #tpu.memory_space<vmem>>, vector<128x128xf32>
    %cst = arith.constant dense<0.000000e+00> : vector<128x128xf32>
    %5 = tpu.matmul %3, %4, %cst {dimension_numbers = #tpu.dot_dimension_numbers<[1], [0], [0], [1], [0, 0, 1, 1], [], []>} : vector<128x128xf32>, vector<128x128xf32>, vector<128x128xf32> -> vector<128x128xf32>
    %c0_4 = arith.constant 0 : index
    %c0_5 = arith.constant 0 : index
    %6 = vector.load %arg4[%c0_4, %c0_5] : memref<1x128xf32, #tpu.memory_space<vmem>>, vector<1x128xf32>
    %7 = vector.broadcast %6 : vector<1x128xf32> to vector<128x128xf32>
    %8 = arith.addf %5, %7 : vector<128x128xf32>
    %cst_6 = arith.constant 5.000000e-01 : f32
    %9 = vector.broadcast %cst_6 : f32 to vector<128x128xf32>
    %10 = arith.mulf %9, %8 : vector<128x128xf32>
    %cst_7 = arith.constant 0.707106769 : f32
    %11 = vector.broadcast %cst_7 : f32 to vector<128x128xf32>
    %12 = arith.mulf %8, %11 : vector<128x128xf32>
    %13 = math.erf %12 : vector<128x128xf32>
    %cst_8 = arith.constant 1.000000e+00 : f32
    %14 = vector.broadcast %cst_8 : f32 to vector<128x128xf32>
    %15 = arith.addf %14, %13 : vector<128x128xf32>
    %16 = arith.mulf %10, %15 : vector<128x128xf32>
    %c0_9 = arith.constant 0 : index
    %c0_10 = arith.constant 0 : index
    %17 = vector.load %arg8[%c0_9, %c0_10] : memref<128x128xf32, #tpu.memory_space<vmem>>, vector<128x128xf32>
    %c0_11 = arith.constant 0 : index
    %c0_12 = arith.constant 0 : index
    %18 = vector.load %arg5[%c0_11, %c0_12] : memref<128x128xf32, #tpu.memory_space<vmem>>, vector<128x128xf32>
    %cst_13 = arith.constant dense<0.000000e+00> : vector<128x128xf32>
    %19 = tpu.matmul %16, %18, %cst_13 {dimension_numbers = #tpu.dot_dimension_numbers<[1], [0], [0], [1], [0, 0, 1, 1], [], []>} : vector<128x128xf32>, vector<128x128xf32>, vector<128x128xf32> -> vector<128x128xf32>
    %20 = arith.addf %17, %19 : vector<128x128xf32>
    %c0_14 = arith.constant 0 : index
    %c0_15 = arith.constant 0 : index
    %21 = vector.load %arg8[%c0_14, %c0_15] : memref<128x128xf32, #tpu.memory_space<vmem>>, vector<128x128xf32>
    tpu.vector_store %arg8[%c0_14, %c0_15], %20 {strides = array<i32>} : memref<128x128xf32, #tpu.memory_space<vmem>>, vector<128x128xf32>,
    %c0_i32_16 = arith.constant 0 : i32
    %22 = arith.cmpi eq, %arg1, %c0_i32_16 : i32
    %23 = arith.extui %22 : i1 to i32
    %c0_i32_17 = arith.constant 0 : i32
    %24 = arith.cmpi ne, %23, %c0_i32_17 : i32
    scf.if %24 {
      %c0_18 = arith.constant 0 : index
      %c0_19 = arith.constant 0 : index
      %25 = vector.load %arg8[%c0_18, %c0_19] : memref<128x128xf32, #tpu.memory_space<vmem>>, vector<128x128xf32>
      %c0_20 = arith.constant 0 : index
      %c0_21 = arith.constant 0 : index
      %26 = vector.load %arg6[%c0_20, %c0_21] : memref<1x128xf32, #tpu.memory_space<vmem>>, vector<1x128xf32>
      %27 = vector.broadcast %26 : vector<1x128xf32> to vector<128x128xf32>
      %28 = arith.addf %25, %27 : vector<128x128xf32>
      %c0_22 = arith.constant 0 : index
      %c0_23 = arith.constant 0 : index
      %29 = vector.load %arg7[%c0_22, %c0_23] : memref<128x128xf32, #tpu.memory_space<vmem>>, vector<128x128xf32>
      tpu.vector_store %arg7[%c0_22, %c0_23], %28 {strides = array<i32>} : memref<128x128xf32, #tpu.memory_space<vmem>>, vector<128x128xf32>,
    } else {
    }
    return
  }
  func.func @transform_0(%arg0: i32, %arg1: i32) -> (i32, i32) {
    %c0_i32 = arith.constant 0 : i32
    %c0_i32_0 = arith.constant 0 : i32
    return %arg0, %c0_i32 : i32, i32
  }
  func.func @transform_1(%arg0: i32, %arg1: i32) -> (i32, i32) {
    %c0_i32 = arith.constant 0 : i32
    %c0_i32_0 = arith.constant 0 : i32
    return %c0_i32, %arg1 : i32, i32
  }
  func.func @transform_2(%arg0: i32, %arg1: i32) -> (i32, i32) {
    %c0_i32 = arith.constant 0 : i32
    %c0_i32_0 = arith.constant 0 : i32
    return %c0_i32, %arg1 : i32, i32
  }
  func.func @transform_3(%arg0: i32, %arg1: i32) -> (i32, i32) {
    %c0_i32 = arith.constant 0 : i32
    %c0_i32_0 = arith.constant 0 : i32
    return %arg1, %c0_i32 : i32, i32
  }
  func.func @transform_4(%arg0: i32, %arg1: i32) -> (i32, i32) {
    %c0_i32 = arith.constant 0 : i32
    %c0_i32_0 = arith.constant 0 : i32
    %c0_i32_1 = arith.constant 0 : i32
    return %c0_i32, %c0_i32_0 : i32, i32
  }
  func.func @transform_5(%arg0: i32, %arg1: i32) -> (i32, i32) {
    %c0_i32 = arith.constant 0 : i32
    %c0_i32_0 = arith.constant 0 : i32
    return %arg0, %c0_i32 : i32, i32
  }
}

</mosaic_0001>

<llo_original>
// kernel: tpu_custom_call.1
$region0: #{tpu_custom_call.1}
  #allocation0 [shape = 'u32[]', space=smem, size = 0x4, offset = 0x4, fixed_abs, tag = 'smem constant byte address 0x4 - core index']
  #allocation1 [shape = 'u32[144,128]{1,0:T(1,128)}', space=vmem, size = 0x12000, scoped, tag = 'internal scratch']
  #allocation2 [shape = 'f32[128,128]{1,0:T(8,128)}', space=vmem, size = 0x10000, scoped, tag = 'scratch operand']
  %s0 = inlined_call_operand.hbm [shape: f32[128,128], index: 0, kind: input, shape index: {}]
  %s1 = inlined_call_operand.hbm [shape: f32[128,128], index: 1, kind: input, shape index: {}]
  %s2 = inlined_call_operand.vmem [shape: f32[1,128], index: 2, kind: input, shape index: {}]
  %s3 = inlined_call_operand.hbm [shape: f32[128,128], index: 3, kind: input, shape index: {}]
  %s4 = inlined_call_operand.vmem [shape: f32[1,128], index: 4, kind: input, shape index: {}]
  %s5 = inlined_call_operand.hbm [shape: f32[128,128], index: 5, kind: output, shape index: {}]
  %s6 = sld [smem:[#allocation0]]
  $region50: #{tpu_custom_call.1} parent=0
    _
  %s8 = ssub.s32 1, %s6
  %s9 = scalar_select 0, %s8, %s6
  $region1: #{tpu_custom_call.1} parent=0
    #allocation3 [shape = 'u8[65536]{0}', space=vmem, size = 0x10000, scoped, tag = 'input window, operand 0, single buffered']
    #allocation4 [shape = 's32[1]{0}', space=sflag, size = 0x4, scoped, tag = 'scoped memory for tpu_custom_call.1']
    #allocation5 [shape = 's32[1]{0}', space=sflag, size = 0x4, scoped, tag = 'scoped memory for tpu_custom_call.1']
    #allocation6 [shape = 'u8[65536]{0}', space=vmem, size = 0x10000, scoped, tag = 'input window, operand 1, single buffered']
    #allocation7 [shape = 's32[1]{0}', space=sflag, size = 0x4, scoped, tag = 'scoped memory for tpu_custom_call.1']
    #allocation8 [shape = 'u8[65536]{0}', space=vmem, size = 0x10000, scoped, tag = 'input window, operand 3, single buffered']
    #allocation9 [shape = 'u8[65536]{0}', space=vmem, size = 0x10000, scoped, tag = 'output window, operand 0, single buffered']
    %10 = vsyncpa [#allocation4], 0
    %11 = vsyncpa [#allocation7], 0
    %12 = vsyncpa [#allocation5], 0
    // Predicated region
    $region2: #{tpu_custom_call.1} parent=1 // pred_check
      _
    $region3: #{tpu_custom_call.1} parent=1 // pred_check_branch
      %14 = sbr.rel (0) target = $region5
    $region4: #{tpu_custom_call.1} parent=1 // pred_region
      %s16 = ssub.s32 2048, 2048
      %17 = vsyncadd [#allocation4], %s16
      %s18 = sshll.u32 [#allocation3], 4
      %s19 = int_to_ptr.vmem [resolvable:$true] %s18
      %24 = dma.hbm_to_vmem [thread:$0]  %s0, 2048, %s19, [#allocation4], 128, 128, 8
    $region5: #{tpu_custom_call.1} parent=1 // pred_fallthru
      _
    // Predicated region
    $region6: #{tpu_custom_call.1} parent=1 // pred_check
      _
    $region7: #{tpu_custom_call.1} parent=1 // pred_check_branch
      %26 = sbr.rel (0) target = $region9
    $region8: #{tpu_custom_call.1} parent=1 // pred_region
      %s28 = ssub.s32 2048, 2048
      %29 = vsyncadd [#allocation7], %s28
      %s30 = sshll.u32 [#allocation6], 4
      %s31 = int_to_ptr.vmem [resolvable:$true] %s30
      %36 = dma.hbm_to_vmem [thread:$0]  %s1, 2048, %s31, [#allocation7], 128, 128, 8
    $region9: #{tpu_custom_call.1} parent=1 // pred_fallthru
      _
    // Predicated region
    $region10: #{tpu_custom_call.1} parent=1 // pred_check
      _
    $region11: #{tpu_custom_call.1} parent=1 // pred_check_branch
      %38 = sbr.rel (0) target = $region13
    $region12: #{tpu_custom_call.1} parent=1 // pred_region
      _
    $region13: #{tpu_custom_call.1} parent=1 // pred_fallthru
      _
    // Predicated region
    $region14: #{tpu_custom_call.1} parent=1 // pred_check
      _
    $region15: #{tpu_custom_call.1} parent=1 // pred_check_branch
      %40 = sbr.rel (0) target = $region17
    $region16: #{tpu_custom_call.1} parent=1 // pred_region
      %s42 = ssub.s32 2048, 2048
      %43 = vsyncadd [#allocation7], %s42
      %s44 = sshll.u32 [#allocation8], 4
      %s45 = int_to_ptr.vmem [resolvable:$true] %s44
      %50 = dma.hbm_to_vmem [thread:$0]  %s3, 2048, %s45, [#allocation7], 128, 128, 8
    $region17: #{tpu_custom_call.1} parent=1 // pred_fallthru
      _
    // Predicated region
    $region18: #{tpu_custom_call.1} parent=1 // pred_check
      _
    $region19: #{tpu_custom_call.1} parent=1 // pred_check_branch
      %52 = sbr.rel (0) target = $region21
    $region20: #{tpu_custom_call.1} parent=1 // pred_region
      _
    $region21: #{tpu_custom_call.1} parent=1 // pred_fallthru
      _
    // Predicated region
    $region22: #{tpu_custom_call.1} parent=1 // pred_check
      _
    $region23: #{tpu_custom_call.1} parent=1 // pred_check_branch
      %54 = sbr.rel (0) target = $region25
    $region24: #{tpu_custom_call.1} parent=1 // pred_region
      %55 = dma.done [#allocation4], 2048
    $region25: #{tpu_custom_call.1} parent=1 // pred_fallthru
      _
    // Predicated region
    $region26: #{tpu_custom_call.1} parent=1 // pred_check
      _
    $region27: #{tpu_custom_call.1} parent=1 // pred_check_branch
      %57 = sbr.rel (0) target = $region29
    $region28: #{tpu_custom_call.1} parent=1 // pred_region
      %58 = dma.done [#allocation7], 2048
    $region29: #{tpu_custom_call.1} parent=1 // pred_fallthru
      _
    // Predicated region
    $region30: #{tpu_custom_call.1} parent=1 // pred_check
      _
    $region31: #{tpu_custom_call.1} parent=1 // pred_check_branch
      %60 = sbr.rel (0) target = $region33
    $region32: #{tpu_custom_call.1} parent=1 // pred_region
      %61 = dma.done [#allocation7], 2048
    $region33: #{tpu_custom_call.1} parent=1 // pred_fallthru
      _
    %p62 = scmp.eq.s32.totalorder 0, 0
    // Predicated region
    $region34: #{tpu_custom_call.1} parent=1 // pred_check
      %p63 = pneg %p62
    $region35: #{tpu_custom_call.1} parent=1 // pred_check_branch
      %65 = sbr.rel (%p63) target = $region37
    $region36: #{tpu_custom_call.1} parent=1 // pred_region
      %66 = vst [vmem:[#allocation2] sm:$0xff] 0.0
      %67 = vst [vmem:[#allocation2 + $0x8] sm:$0xff] 0.0
      %68 = vst [vmem:[#allocation2 + $0x10] sm:$0xff] 0.0
      %69 = vst [vmem:[#allocation2 + $0x18] sm:$0xff] 0.0
      %70 = vst [vmem:[#allocation2 + $0x20] sm:$0xff] 0.0
      %71 = vst [vmem:[#allocation2 + $0x28] sm:$0xff] 0.0
      %72 = vst [vmem:[#allocation2 + $0x30] sm:$0xff] 0.0
      %73 = vst [vmem:[#allocation2 + $0x38] sm:$0xff] 0.0
      %74 = vst [vmem:[#allocation2 + $0x40] sm:$0xff] 0.0
      %75 = vst [vmem:[#allocation2 + $0x48] sm:$0xff] 0.0
      %76 = vst [vmem:[#allocation2 + $0x50] sm:$0xff] 0.0
      %77 = vst [vmem:[#allocation2 + $0x58] sm:$0xff] 0.0
      %78 = vst [vmem:[#allocation2 + $0x60] sm:$0xff] 0.0
      %79 = vst [vmem:[#allocation2 + $0x68] sm:$0xff] 0.0
      %80 = vst [vmem:[#allocation2 + $0x70] sm:$0xff] 0.0
      %81 = vst [vmem:[#allocation2 + $0x78] sm:$0xff] 0.0
    $region37: #{tpu_custom_call.1} parent=1 // pred_fallthru
      _
    %v82 = vld [vmem:[#allocation3] sm:$0xff]
    %v83 = vld [vmem:[#allocation3 + $0x8] sm:$0xff]
    %v84 = vld [vmem:[#allocation3 + $0x10] sm:$0xff]
    %v85 = vld [vmem:[#allocation3 + $0x18] sm:$0xff]
    %v86 = vld [vmem:[#allocation3 + $0x20] sm:$0xff]
    %v87 = vld [vmem:[#allocation3 + $0x28] sm:$0xff]
    %v88 = vld [vmem:[#allocation3 + $0x30] sm:$0xff]
    %v89 = vld [vmem:[#allocation3 + $0x38] sm:$0xff]
    %v90 = vld [vmem:[#allocation3 + $0x40] sm:$0xff]
    %v91 = vld [vmem:[#allocation3 + $0x48] sm:$0xff]
    %v92 = vld [vmem:[#allocation3 + $0x50] sm:$0xff]
    %v93 = vld [vmem:[#allocation3 + $0x58] sm:$0xff]
    %v94 = vld [vmem:[#allocation3 + $0x60] sm:$0xff]
    %v95 = vld [vmem:[#allocation3 + $0x68] sm:$0xff]
    %v96 = vld [vmem:[#allocation3 + $0x70] sm:$0xff]
    %v97 = vld [vmem:[#allocation3 + $0x78] sm:$0xff]
    %v98 = vld [vmem:[#allocation6] sm:$0xff]
    %v99 = vld [vmem:[#allocation6 + $0x8] sm:$0xff]
    %v100 = vld [vmem:[#allocation6 + $0x10] sm:$0xff]
    %v101 = vld [vmem:[#allocation6 + $0x18] sm:$0xff]
    %v102 = vld [vmem:[#allocation6 + $0x20] sm:$0xff]
    %v103 = vld [vmem:[#allocation6 + $0x28] sm:$0xff]
    %v104 = vld [vmem:[#allocation6 + $0x30] sm:$0xff]
    %v105 = vld [vmem:[#allocation6 + $0x38] sm:$0xff]
    %v106 = vld [vmem:[#allocation6 + $0x40] sm:$0xff]
    %v107 = vld [vmem:[#allocation6 + $0x48] sm:$0xff]
    %v108 = vld [vmem:[#allocation6 + $0x50] sm:$0xff]
    %v109 = vld [vmem:[#allocation6 + $0x58] sm:$0xff]
    %v110 = vld [vmem:[#allocation6 + $0x60] sm:$0xff]
    %v111 = vld [vmem:[#allocation6 + $0x68] sm:$0xff]
    %v112 = vld [vmem:[#allocation6 + $0x70] sm:$0xff]
    %v113 = vld [vmem:[#allocation6 + $0x78] sm:$0xff]
    %v114 = vld [vmem:[%s2] sm:$0x1]
    %v116 = vlaneseq
    %v117 = vshrl.u32 %v116, 7
    %v118 = vsub.s32 0, %v117
    %v119 = vrot.slane %v114, %v118
    %121 = vmatprep.subr.mxu0 0.0
    %122 = vmatpush1.msra.mxu0 %v113
    %123 = vmatprep.subr.mxu0 0.0
    %124 = vmatpush1.msra.mxu0 %v112
    %125 = vmatprep.subr.mxu0 0.0
    %126 = vmatpush1.msra.mxu0 %v111
    %127 = vmatprep.subr.mxu0 0.0
    %128 = vmatpush1.msra.mxu0 %v110
    %129 = vmatprep.subr.mxu0 0.0
    %130 = vmatpush1.msra.mxu0 %v109
    %131 = vmatprep.subr.mxu0 0.0
    %132 = vmatpush1.msra.mxu0 %v108
    %133 = vmatprep.subr.mxu0 0.0
    %134 = vmatpush1.msra.mxu0 %v107
    %135 = vmatprep.subr.mxu0 0.0
    %136 = vmatpush1.msra.mxu0 %v106
    %137 = vmatprep.subr.mxu0 0.0
    %138 = vmatpush1.msra.mxu0 %v105
    %139 = vmatprep.subr.mxu0 0.0
    %140 = vmatpush1.msra.mxu0 %v104
    %141 = vmatprep.subr.mxu0 0.0
    %142 = vmatpush1.msra.mxu0 %v103
    %143 = vmatprep.subr.mxu0 0.0
    %144 = vmatpush1.msra.mxu0 %v102
    %145 = vmatprep.subr.mxu0 0.0
    %146 = vmatpush1.msra.mxu0 %v101
    %147 = vmatprep.subr.mxu0 0.0
    %148 = vmatpush1.msra.mxu0 %v100
    %149 = vmatprep.subr.mxu0 0.0
    %150 = vmatpush1.msra.mxu0 %v99
    %151 = vmatprep.subr.mxu0 0.0
    %152 = vmatpush1.msra.mxu0 %v98
    %153 = vmatprep.subr.mxu0 0.0
    %154 = vmatpush2.msra.mxu0 0.0
    %155 = vmatprep.subr.mxu0 0.0
    %156 = vmatpush2.msra.mxu0 0.0
    %157 = vmatprep.subr.mxu0 0.0
    %158 = vmatpush2.msra.mxu0 0.0
    %159 = vmatprep.subr.mxu0 0.0
    %160 = vmatpush2.msra.mxu0 0.0
    %161 = vmatprep.subr.mxu0 0.0
    %162 = vmatpush2.msra.mxu0 0.0
    %163 = vmatprep.subr.mxu0 0.0
    %164 = vmatpush2.msra.mxu0 0.0
    %165 = vmatprep.subr.mxu0 0.0
    %166 = vmatpush2.msra.mxu0 0.0
    %167 = vmatprep.subr.mxu0 0.0
    %168 = vmatpush2.msra.mxu0 0.0
    %169 = vmatprep.subr.mxu0 0.0
    %170 = vmatpush2.msra.mxu0 0.0
    %171 = vmatprep.subr.mxu0 0.0
    %172 = vmatpush2.msra.mxu0 0.0
    %173 = vmatprep.subr.mxu0 0.0
    %174 = vmatpush2.msra.mxu0 0.0
    %175 = vmatprep.subr.mxu0 0.0
    %176 = vmatpush2.msra.mxu0 0.0
    %177 = vmatprep.subr.mxu0 0.0
    %178 = vmatpush2.msra.mxu0 0.0
    %179 = vmatprep.subr.mxu0 0.0
    %180 = vmatpush2.msra.mxu0 0.0
    %181 = vmatprep.subr.mxu0 0.0
    %182 = vmatpush2.msra.mxu0 0.0
    %183 = vmatprep.subr.mxu0 0.0
    %184 = vmatpush2.msra.mxu0 0.0
    %185 = vmatprep.mubr.f32.mxu0 0.0
    %186 = vmatmul.mubr.f32.gmra.mxu0 %v82
    %v187 = vpop.f32.mrf.mxu0
    %v188 = vadd.f32 %v119, %v187
    %v189 = vpop.f32.mrf.mxu0
    %190 = vmatprep.mubr.f32.mxu0 0.0
    %191 = vmatmul.mubr.f32.gmra.mxu0 %v83
    %v192 = vpop.f32.mrf.mxu0
    %v193 = vadd.f32 %v119, %v192
    %v194 = vpop.f32.mrf.mxu0
    %195 = vmatprep.mubr.f32.mxu0 0.0
    %196 = vmatmul.mubr.f32.gmra.mxu0 %v84
    %v197 = vpop.f32.mrf.mxu0
    %v198 = vadd.f32 %v119, %v197
    %v199 = vpop.f32.mrf.mxu0
    %200 = vmatprep.mubr.f32.mxu0 0.0
    %201 = vmatmul.mubr.f32.gmra.mxu0 %v85
    %v202 = vpop.f32.mrf.mxu0
    %v203 = vadd.f32 %v119, %v202
    %v204 = vpop.f32.mrf.mxu0
    %205 = vmatprep.mubr.f32.mxu0 0.0
    %206 = vmatmul.mubr.f32.gmra.mxu0 %v86
    %v207 = vpop.f32.mrf.mxu0
    %v208 = vadd.f32 %v119, %v207
    %v209 = vpop.f32.mrf.mxu0
    %210 = vmatprep.mubr.f32.mxu0 0.0
    %211 = vmatmul.mubr.f32.gmra.mxu0 %v87
    %v212 = vpop.f32.mrf.mxu0
    %v213 = vadd.f32 %v119, %v212
    %v214 = vpop.f32.mrf.mxu0
    %215 = vmatprep.mubr.f32.mxu0 0.0
    %216 = vmatmul.mubr.f32.gmra.mxu0 %v88
    %v217 = vpop.f32.mrf.mxu0
    %v218 = vadd.f32 %v119, %v217
    %v219 = vpop.f32.mrf.mxu0
    %220 = vmatprep.mubr.f32.mxu0 0.0
    %221 = vmatmul.mubr.f32.gmra.mxu0 %v89
    %v222 = vpop.f32.mrf.mxu0
    %v223 = vadd.f32 %v119, %v222
    %v224 = vpop.f32.mrf.mxu0
    %225 = vmatprep.mubr.f32.mxu0 0.0
    %226 = vmatmul.mubr.f32.gmra.mxu0 %v90
    %v227 = vpop.f32.mrf.mxu0
    %v228 = vadd.f32 %v119, %v227
    %v229 = vpop.f32.mrf.mxu0
    %230 = vmatprep.mubr.f32.mxu0 0.0
    %231 = vmatmul.mubr.f32.gmra.mxu0 %v91
    %v232 = vpop.f32.mrf.mxu0
    %v233 = vadd.f32 %v119, %v232
    %v234 = vpop.f32.mrf.mxu0
    %235 = vmatprep.mubr.f32.mxu0 0.0
    %236 = vmatmul.mubr.f32.gmra.mxu0 %v92
    %v237 = vpop.f32.mrf.mxu0
    %v238 = vadd.f32 %v119, %v237
    %v239 = vpop.f32.mrf.mxu0
    %240 = vmatprep.mubr.f32.mxu0 0.0
    %241 = vmatmul.mubr.f32.gmra.mxu0 %v93
    %v242 = vpop.f32.mrf.mxu0
    %v243 = vadd.f32 %v119, %v242
    %v244 = vpop.f32.mrf.mxu0
    %245 = vmatprep.mubr.f32.mxu0 0.0
    %246 = vmatmul.mubr.f32.gmra.mxu0 %v94
    %v247 = vpop.f32.mrf.mxu0
    %v248 = vadd.f32 %v119, %v247
    %v249 = vpop.f32.mrf.mxu0
    %250 = vmatprep.mubr.f32.mxu0 0.0
    %251 = vmatmul.mubr.f32.gmra.mxu0 %v95
    %v252 = vpop.f32.mrf.mxu0
    %v253 = vadd.f32 %v119, %v252
    %v254 = vpop.f32.mrf.mxu0
    %255 = vmatprep.mubr.f32.mxu0 0.0
    %256 = vmatmul.mubr.f32.gmra.mxu0 %v96
    %v257 = vpop.f32.mrf.mxu0
    %v258 = vadd.f32 %v119, %v257
    %v259 = vpop.f32.mrf.mxu0
    %260 = vmatprep.mubr.f32.mxu0 0.0
    %261 = vmatmul.mubr.f32.gmra.mxu0 %v97
    %v262 = vpop.f32.mrf.mxu0
    %v263 = vadd.f32 %v119, %v262
    %v264 = vpop.f32.mrf.mxu0
    %265 = vdwg.mxu0
    %v266 = vmul.f32 %v188, 0.5
    %v267 = vmul.f32 %v193, 0.5
    %v268 = vmul.f32 %v198, 0.5
    %v269 = vmul.f32 %v203, 0.5
    %v270 = vmul.f32 %v208, 0.5
    %v271 = vmul.f32 %v213, 0.5
    %v272 = vmul.f32 %v218, 0.5
    %v273 = vmul.f32 %v223, 0.5
    %v274 = vmul.f32 %v228, 0.5
    %v275 = vmul.f32 %v233, 0.5
    %v276 = vmul.f32 %v238, 0.5
    %v277 = vmul.f32 %v243, 0.5
    %v278 = vmul.f32 %v248, 0.5
    %v279 = vmul.f32 %v253, 0.5
    %v280 = vmul.f32 %v258, 0.5
    %v281 = vmul.f32 %v263, 0.5
    %v282 = vmul.f32 %v188, 0.70710677
    %v283 = vmul.f32 %v193, 0.70710677
    %v284 = vmul.f32 %v198, 0.70710677
    %v285 = vmul.f32 %v203, 0.70710677
    %v286 = vmul.f32 %v208, 0.70710677
    %v287 = vmul.f32 %v213, 0.70710677
    %v288 = vmul.f32 %v218, 0.70710677
    %v289 = vmul.f32 %v223, 0.70710677
    %v290 = vmul.f32 %v228, 0.70710677
    %v291 = vmul.f32 %v233, 0.70710677
    %v292 = vmul.f32 %v238, 0.70710677
    %v293 = vmul.f32 %v243, 0.70710677
    %v294 = vmul.f32 %v248, 0.70710677
    %v295 = vmul.f32 %v253, 0.70710677
    %v296 = vmul.f32 %v258, 0.70710677
    %v297 = vmul.f32 %v263, 0.70710677
    %v298 = verf.f32.pop %v282
    %v299 = verf.f32.pop %v283
    %v300 = verf.f32.pop %v284
    %v301 = verf.f32.pop %v285
    %v302 = verf.f32.pop %v286
    %v303 = verf.f32.pop %v287
    %v304 = verf.f32.pop %v288
    %v305 = verf.f32.pop %v289
    %v306 = verf.f32.pop %v290
    %v307 = verf.f32.pop %v291
    %v308 = verf.f32.pop %v292
    %v309 = verf.f32.pop %v293
    %v310 = verf.f32.pop %v294
    %v311 = verf.f32.pop %v295
    %v312 = verf.f32.pop %v296
    %v313 = verf.f32.pop %v297
    %v314 = vadd.f32 %v298, 1.0
    %v315 = vadd.f32 %v299, 1.0
    %v316 = vadd.f32 %v300, 1.0
    %v317 = vadd.f32 %v301, 1.0
    %v318 = vadd.f32 %v302, 1.0
    %v319 = vadd.f32 %v303, 1.0
    %v320 = vadd.f32 %v304, 1.0
    %v321 = vadd.f32 %v305, 1.0
    %v322 = vadd.f32 %v306, 1.0
    %v323 = vadd.f32 %v307, 1.0
    %v324 = vadd.f32 %v308, 1.0
    %v325 = vadd.f32 %v309, 1.0
    %v326 = vadd.f32 %v310, 1.0
    %v327 = vadd.f32 %v311, 1.0
    %v328 = vadd.f32 %v312, 1.0
    %v329 = vadd.f32 %v313, 1.0
    %v330 = vmul.f32 %v266, %v314
    %v331 = vmul.f32 %v267, %v315
    %v332 = vmul.f32 %v268, %v316
    %v333 = vmul.f32 %v269, %v317
    %v334 = vmul.f32 %v270, %v318
    %v335 = vmul.f32 %v271, %v319
    %v336 = vmul.f32 %v272, %v320
    %v337 = vmul.f32 %v273, %v321
    %v338 = vmul.f32 %v274, %v322
    %v339 = vmul.f32 %v275, %v323
    %v340 = vmul.f32 %v276, %v324
    %v341 = vmul.f32 %v277, %v325
    %v342 = vmul.f32 %v278, %v326
    %v343 = vmul.f32 %v279, %v327
    %v344 = vmul.f32 %v280, %v328
    %v345 = vmul.f32 %v281, %v329
    %v346 = vld [vmem:[#allocation2] sm:$0xff]
    %v347 = vld [vmem:[#allocation2 + $0x8] sm:$0xff]
    %v348 = vld [vmem:[#allocation2 + $0x10] sm:$0xff]
    %v349 = vld [vmem:[#allocation2 + $0x18] sm:$0xff]
    %v350 = vld [vmem:[#allocation2 + $0x20] sm:$0xff]
    %v351 = vld [vmem:[#allocation2 + $0x28] sm:$0xff]
    %v352 = vld [vmem:[#allocation2 + $0x30] sm:$0xff]
    %v353 = vld [vmem:[#allocation2 + $0x38] sm:$0xff]
    %v354 = vld [vmem:[#allocation2 + $0x40] sm:$0xff]
    %v355 = vld [vmem:[#allocation2 + $0x48] sm:$0xff]
    %v356 = vld [vmem:[#allocation2 + $0x50] sm:$0xff]
    %v357 = vld [vmem:[#allocation2 + $0x58] sm:$0xff]
    %v358 = vld [vmem:[#allocation2 + $0x60] sm:$0xff]
    %v359 = vld [vmem:[#allocation2 + $0x68] sm:$0xff]
    %v360 = vld [vmem:[#allocation2 + $0x70] sm:$0xff]
    %v361 = vld [vmem:[#allocation2 + $0x78] sm:$0xff]
    %v362 = vld [vmem:[#allocation8] sm:$0xff]
    %v363 = vld [vmem:[#allocation8 + $0x8] sm:$0xff]
    %v364 = vld [vmem:[#allocation8 + $0x10] sm:$0xff]
    %v365 = vld [vmem:[#allocation8 + $0x18] sm:$0xff]
    %v366 = vld [vmem:[#allocation8 + $0x20] sm:$0xff]
    %v367 = vld [vmem:[#allocation8 + $0x28] sm:$0xff]
    %v368 = vld [vmem:[#allocation8 + $0x30] sm:$0xff]
    %v369 = vld [vmem:[#allocation8 + $0x38] sm:$0xff]
    %v370 = vld [vmem:[#allocation8 + $0x40] sm:$0xff]
    %v371 = vld [vmem:[#allocation8 + $0x48] sm:$0xff]
    %v372 = vld [vmem:[#allocation8 + $0x50] sm:$0xff]
    %v373 = vld [vmem:[#allocation8 + $0x58] sm:$0xff]
    %v374 = vld [vmem:[#allocation8 + $0x60] sm:$0xff]
    %v375 = vld [vmem:[#allocation8 + $0x68] sm:$0xff]
    %v376 = vld [vmem:[#allocation8 + $0x70] sm:$0xff]
    %v377 = vld [vmem:[#allocation8 + $0x78] sm:$0xff]
    %378 = vmatprep.subr.mxu0 0.0
    %379 = vmatpush1.msra.mxu0 %v377
    %380 = vmatprep.subr.mxu0 0.0
    %381 = vmatpush1.msra.mxu0 %v376
    %382 = vmatprep.subr.mxu0 0.0
    %383 = vmatpush1.msra.mxu0 %v375
    %384 = vmatprep.subr.mxu0 0.0
    %385 = vmatpush1.msra.mxu0 %v374
    %386 = vmatprep.subr.mxu0 0.0
    %387 = vmatpush1.msra.mxu0 %v373
    %388 = vmatprep.subr.mxu0 0.0
    %389 = vmatpush1.msra.mxu0 %v372
    %390 = vmatprep.subr.mxu0 0.0
    %391 = vmatpush1.msra.mxu0 %v371
    %392 = vmatprep.subr.mxu0 0.0
    %393 = vmatpush1.msra.mxu0 %v370
    %394 = vmatprep.subr.mxu0 0.0
    %395 = vmatpush1.msra.mxu0 %v369
    %396 = vmatprep.subr.mxu0 0.0
    %397 = vmatpush1.msra.mxu0 %v368
    %398 = vmatprep.subr.mxu0 0.0
    %399 = vmatpush1.msra.mxu0 %v367
    %400 = vmatprep.subr.mxu0 0.0
    %401 = vmatpush1.msra.mxu0 %v366
    %402 = vmatprep.subr.mxu0 0.0
    %403 = vmatpush1.msra.mxu0 %v365
    %404 = vmatprep.subr.mxu0 0.0
    %405 = vmatpush1.msra.mxu0 %v364
    %406 = vmatprep.subr.mxu0 0.0
    %407 = vmatpush1.msra.mxu0 %v363
    %408 = vmatprep.subr.mxu0 0.0
    %409 = vmatpush1.msra.mxu0 %v362
    %410 = vmatprep.subr.mxu0 0.0
    %411 = vmatpush2.msra.mxu0 0.0
    %412 = vmatprep.subr.mxu0 0.0
    %413 = vmatpush2.msra.mxu0 0.0
    %414 = vmatprep.subr.mxu0 0.0
    %415 = vmatpush2.msra.mxu0 0.0
    %416 = vmatprep.subr.mxu0 0.0
    %417 = vmatpush2.msra.mxu0 0.0
    %418 = vmatprep.subr.mxu0 0.0
    %419 = vmatpush2.msra.mxu0 0.0
    %420 = vmatprep.subr.mxu0 0.0
    %421 = vmatpush2.msra.mxu0 0.0
    %422 = vmatprep.subr.mxu0 0.0
    %423 = vmatpush2.msra.mxu0 0.0
    %424 = vmatprep.subr.mxu0 0.0
    %425 = vmatpush2.msra.mxu0 0.0
    %426 = vmatprep.subr.mxu0 0.0
    %427 = vmatpush2.msra.mxu0 0.0
    %428 = vmatprep.subr.mxu0 0.0
    %429 = vmatpush2.msra.mxu0 0.0
    %430 = vmatprep.subr.mxu0 0.0
    %431 = vmatpush2.msra.mxu0 0.0
    %432 = vmatprep.subr.mxu0 0.0
    %433 = vmatpush2.msra.mxu0 0.0
    %434 = vmatprep.subr.mxu0 0.0
    %435 = vmatpush2.msra.mxu0 0.0
    %436 = vmatprep.subr.mxu0 0.0
    %437 = vmatpush2.msra.mxu0 0.0
    %438 = vmatprep.subr.mxu0 0.0
    %439 = vmatpush2.msra.mxu0 0.0
    %440 = vmatprep.subr.mxu0 0.0
    %441 = vmatpush2.msra.mxu0 0.0
    %442 = vmatprep.mubr.f32.mxu0 0.0
    %443 = vmatmul.mubr.f32.gmra.mxu0 %v330
    %v444 = vpop.f32.mrf.mxu0
    %v445 = vadd.f32 0.0, %v444
    %v446 = vpop.f32.mrf.mxu0
    %447 = vmatprep.mubr.f32.mxu0 0.0
    %448 = vmatmul.mubr.f32.gmra.mxu0 %v331
    %v449 = vpop.f32.mrf.mxu0
    %v450 = vadd.f32 0.0, %v449
    %v451 = vpop.f32.mrf.mxu0
    %452 = vmatprep.mubr.f32.mxu0 0.0
    %453 = vmatmul.mubr.f32.gmra.mxu0 %v332
    %v454 = vpop.f32.mrf.mxu0
    %v455 = vadd.f32 0.0, %v454
    %v456 = vpop.f32.mrf.mxu0
    %457 = vmatprep.mubr.f32.mxu0 0.0
    %458 = vmatmul.mubr.f32.gmra.mxu0 %v333
    %v459 = vpop.f32.mrf.mxu0
    %v460 = vadd.f32 0.0, %v459
    %v461 = vpop.f32.mrf.mxu0
    %462 = vmatprep.mubr.f32.mxu0 0.0
    %463 = vmatmul.mubr.f32.gmra.mxu0 %v334
    %v464 = vpop.f32.mrf.mxu0
    %v465 = vadd.f32 0.0, %v464
    %v466 = vpop.f32.mrf.mxu0
    %467 = vmatprep.mubr.f32.mxu0 0.0
    %468 = vmatmul.mubr.f32.gmra.mxu0 %v335
    %v469 = vpop.f32.mrf.mxu0
    %v470 = vadd.f32 0.0, %v469
    %v471 = vpop.f32.mrf.mxu0
    %472 = vmatprep.mubr.f32.mxu0 0.0
    %473 = vmatmul.mubr.f32.gmra.mxu0 %v336
    %v474 = vpop.f32.mrf.mxu0
    %v475 = vadd.f32 0.0, %v474
    %v476 = vpop.f32.mrf.mxu0
    %477 = vmatprep.mubr.f32.mxu0 0.0
    %478 = vmatmul.mubr.f32.gmra.mxu0 %v337
    %v479 = vpop.f32.mrf.mxu0
    %v480 = vadd.f32 0.0, %v479
    %v481 = vpop.f32.mrf.mxu0
    %482 = vmatprep.mubr.f32.mxu0 0.0
    %483 = vmatmul.mubr.f32.gmra.mxu0 %v338
    %v484 = vpop.f32.mrf.mxu0
    %v485 = vadd.f32 0.0, %v484
    %v486 = vpop.f32.mrf.mxu0
    %487 = vmatprep.mubr.f32.mxu0 0.0
    %488 = vmatmul.mubr.f32.gmra.mxu0 %v339
    %v489 = vpop.f32.mrf.mxu0
    %v490 = vadd.f32 0.0, %v489
    %v491 = vpop.f32.mrf.mxu0
    %492 = vmatprep.mubr.f32.mxu0 0.0
    %493 = vmatmul.mubr.f32.gmra.mxu0 %v340
    %v494 = vpop.f32.mrf.mxu0
    %v495 = vadd.f32 0.0, %v494
    %v496 = vpop.f32.mrf.mxu0
    %497 = vmatprep.mubr.f32.mxu0 0.0
    %498 = vmatmul.mubr.f32.gmra.mxu0 %v341
    %v499 = vpop.f32.mrf.mxu0
    %v500 = vadd.f32 0.0, %v499
    %v501 = vpop.f32.mrf.mxu0
    %502 = vmatprep.mubr.f32.mxu0 0.0
    %503 = vmatmul.mubr.f32.gmra.mxu0 %v342
    %v504 = vpop.f32.mrf.mxu0
    %v505 = vadd.f32 0.0, %v504
    %v506 = vpop.f32.mrf.mxu0
    %507 = vmatprep.mubr.f32.mxu0 0.0
    %508 = vmatmul.mubr.f32.gmra.mxu0 %v343
    %v509 = vpop.f32.mrf.mxu0
    %v510 = vadd.f32 0.0, %v509
    %v511 = vpop.f32.mrf.mxu0
    %512 = vmatprep.mubr.f32.mxu0 0.0
    %513 = vmatmul.mubr.f32.gmra.mxu0 %v344
    %v514 = vpop.f32.mrf.mxu0
    %v515 = vadd.f32 0.0, %v514
    %v516 = vpop.f32.mrf.mxu0
    %517 = vmatprep.mubr.f32.mxu0 0.0
    %518 = vmatmul.mubr.f32.gmra.mxu0 %v345
    %v519 = vpop.f32.mrf.mxu0
    %v520 = vadd.f32 0.0, %v519
    %v521 = vpop.f32.mrf.mxu0
    %522 = vdwg.mxu0
    %v523 = vadd.f32 %v346, %v445
    %v524 = vadd.f32 %v347, %v450
    %v525 = vadd.f32 %v348, %v455
    %v526 = vadd.f32 %v349, %v460
    %v527 = vadd.f32 %v350, %v465
    %v528 = vadd.f32 %v351, %v470
    %v529 = vadd.f32 %v352, %v475
    %v530 = vadd.f32 %v353, %v480
    %v531 = vadd.f32 %v354, %v485
    %v532 = vadd.f32 %v355, %v490
    %v533 = vadd.f32 %v356, %v495
    %v534 = vadd.f32 %v357, %v500
    %v535 = vadd.f32 %v358, %v505
    %v536 = vadd.f32 %v359, %v510
    %v537 = vadd.f32 %v360, %v515
    %v538 = vadd.f32 %v361, %v520
    %539 = vst [vmem:[#allocation2] sm:$0xff] %v523
    %540 = vst [vmem:[#allocation2 + $0x8] sm:$0xff] %v524
    %541 = vst [vmem:[#allocation2 + $0x10] sm:$0xff] %v525
    %542 = vst [vmem:[#allocation2 + $0x18] sm:$0xff] %v526
    %543 = vst [vmem:[#allocation2 + $0x20] sm:$0xff] %v527
    %544 = vst [vmem:[#allocation2 + $0x28] sm:$0xff] %v528
    %545 = vst [vmem:[#allocation2 + $0x30] sm:$0xff] %v529
    %546 = vst [vmem:[#allocation2 + $0x38] sm:$0xff] %v530
    %547 = vst [vmem:[#allocation2 + $0x40] sm:$0xff] %v531
    %548 = vst [vmem:[#allocation2 + $0x48] sm:$0xff] %v532
    %549 = vst [vmem:[#allocation2 + $0x50] sm:$0xff] %v533
    %550 = vst [vmem:[#allocation2 + $0x58] sm:$0xff] %v534
    %551 = vst [vmem:[#allocation2 + $0x60] sm:$0xff] %v535
    %552 = vst [vmem:[#allocation2 + $0x68] sm:$0xff] %v536
    %553 = vst [vmem:[#allocation2 + $0x70] sm:$0xff] %v537
    %554 = vst [vmem:[#allocation2 + $0x78] sm:$0xff] %v538
    // Predicated region
    $region38: #{tpu_custom_call.1} parent=1 // pred_check
      %p555 = pneg %p62
    $region39: #{tpu_custom_call.1} parent=1 // pred_check_branch
      %557 = sbr.rel (%p555) target = $region41
    $region40: #{tpu_custom_call.1} parent=1 // pred_region
      %v558 = vld [vmem:[#allocation2] sm:$0xff]
      %v559 = vld [vmem:[#allocation2 + $0x8] sm:$0xff]
      %v560 = vld [vmem:[#allocation2 + $0x10] sm:$0xff]
      %v561 = vld [vmem:[#allocation2 + $0x18] sm:$0xff]
      %v562 = vld [vmem:[#allocation2 + $0x20] sm:$0xff]
      %v563 = vld [vmem:[#allocation2 + $0x28] sm:$0xff]
      %v564 = vld [vmem:[#allocation2 + $0x30] sm:$0xff]
      %v565 = vld [vmem:[#allocation2 + $0x38] sm:$0xff]
      %v566 = vld [vmem:[#allocation2 + $0x40] sm:$0xff]
      %v567 = vld [vmem:[#allocation2 + $0x48] sm:$0xff]
      %v568 = vld [vmem:[#allocation2 + $0x50] sm:$0xff]
      %v569 = vld [vmem:[#allocation2 + $0x58] sm:$0xff]
      %v570 = vld [vmem:[#allocation2 + $0x60] sm:$0xff]
      %v571 = vld [vmem:[#allocation2 + $0x68] sm:$0xff]
      %v572 = vld [vmem:[#allocation2 + $0x70] sm:$0xff]
      %v573 = vld [vmem:[#allocation2 + $0x78] sm:$0xff]
      %v574 = vld [vmem:[%s4] sm:$0x1]
      %v576 = vlaneseq
      %v577 = vshrl.u32 %v576, 7
      %v578 = vsub.s32 0, %v577
      %v579 = vrot.slane %v574, %v578
      %v581 = vadd.f32 %v558, %v579
      %v582 = vadd.f32 %v559, %v579
      %v583 = vadd.f32 %v560, %v579
      %v584 = vadd.f32 %v561, %v579
      %v585 = vadd.f32 %v562, %v579
      %v586 = vadd.f32 %v563, %v579
      %v587 = vadd.f32 %v564, %v579
      %v588 = vadd.f32 %v565, %v579
      %v589 = vadd.f32 %v566, %v579
      %v590 = vadd.f32 %v567, %v579
      %v591 = vadd.f32 %v568, %v579
      %v592 = vadd.f32 %v569, %v579
      %v593 = vadd.f32 %v570, %v579
      %v594 = vadd.f32 %v571, %v579
      %v595 = vadd.f32 %v572, %v579
      %v596 = vadd.f32 %v573, %v579
      %597 = vst [vmem:[#allocation9] sm:$0xff] %v581
      %598 = vst [vmem:[#allocation9 + $0x8] sm:$0xff] %v582
      %599 = vst [vmem:[#allocation9 + $0x10] sm:$0xff] %v583
      %600 = vst [vmem:[#allocation9 + $0x18] sm:$0xff] %v584
      %601 = vst [vmem:[#allocation9 + $0x20] sm:$0xff] %v585
      %602 = vst [vmem:[#allocation9 + $0x28] sm:$0xff] %v586
      %603 = vst [vmem:[#allocation9 + $0x30] sm:$0xff] %v587
      %604 = vst [vmem:[#allocation9 + $0x38] sm:$0xff] %v588
      %605 = vst [vmem:[#allocation9 + $0x40] sm:$0xff] %v589
      %606 = vst [vmem:[#allocation9 + $0x48] sm:$0xff] %v590
      %607 = vst [vmem:[#allocation9 + $0x50] sm:$0xff] %v591
      %608 = vst [vmem:[#allocation9 + $0x58] sm:$0xff] %v592
      %609 = vst [vmem:[#allocation9 + $0x60] sm:$0xff] %v593
      %610 = vst [vmem:[#allocation9 + $0x68] sm:$0xff] %v594
      %611 = vst [vmem:[#allocation9 + $0x70] sm:$0xff] %v595
      %612 = vst [vmem:[#allocation9 + $0x78] sm:$0xff] %v596
    $region41: #{tpu_custom_call.1} parent=1 // pred_fallthru
      _
    // Predicated region
    $region42: #{tpu_custom_call.1} parent=1 // pred_check
      _
    $region43: #{tpu_custom_call.1} parent=1 // pred_check_branch
      %614 = sbr.rel (0) target = $region45
    $region44: #{tpu_custom_call.1} parent=1 // pred_region
      %s616 = ssub.s32 2048, 2048
      %617 = vsyncadd [#allocation5], %s616
      %s618 = sshll.u32 [#allocation9], 4
      %s619 = int_to_ptr.vmem [resolvable:$true] %s618
      %624 = dma.vmem_to_hbm [thread:$0]  %s619, 2048, %s5, [#allocation5], 128, 128, 8
    $region45: #{tpu_custom_call.1} parent=1 // pred_fallthru
      _
    // Predicated region
    $region46: #{tpu_custom_call.1} parent=1 // pred_check
      _
    $region47: #{tpu_custom_call.1} parent=1 // pred_check_branch
      %626 = sbr.rel (0) target = $region49
    $region48: #{tpu_custom_call.1} parent=1 // pred_region
      %627 = dma.done [#allocation5], 2048
    $region49: #{tpu_custom_call.1} parent=1 // pred_fallthru
      _
    %628 = vsyncpa [#allocation4], 1
    %629 = vsyncpa [#allocation7], 1
    %630 = vsyncpa [#allocation5], 1

</llo_original>
